<compile_context>
chip_gen: v6e
topology: v6e:2x2x1
jax: 0.10.0
libtpu: 0.0.40
codegen_flags: <defaults>
</compile_context>

<pallas_src>
import jax
import jax.numpy as jnp
from jax.experimental import pallas as pl
from jax.experimental.pallas import tpu as pltpu

_BN_EPS = 1e-5
_LANE = 128
_SUBLANE = 8
_X_BUFS = 2    # x-tile pipeline depth (bump to 3 if xprof shows exposed x DMA)
_OUT_BUFS = 2  # out-tile pipeline depth


def _round_up(v, m):
    return ((v + m - 1) // m) * m


# --------------------------------------------------------------------------- #
# Kernel: one (row-tile i, K-slice k) grid step.  grid = (rows, K), K innermost
# ("arbitrary").  acc_ref accumulates x @ w1 in f32; on the last K step the
# bias + ReLU + second matmul + bias epilogue runs and the lane-dense
# (class-padded) output tile is stored.
# --------------------------------------------------------------------------- #
def _head_kernel(x_ref, w1_ref, b1_ref, w2_ref, b2_ref, out_ref, acc_ref):
    k = pl.program_id(1)

    @pl.when(k == 0)
    def _():
        acc_ref[...] = jnp.zeros_like(acc_ref)

    acc_ref[...] += jnp.dot(x_ref[...], w1_ref[...],
                            preferred_element_type=jnp.float32)

    @pl.when(k == pl.num_programs(1) - 1)
    def _():
        h = jnp.maximum(acc_ref[...] + b1_ref[...], 0.0)          # bias + ReLU
        y = jnp.dot(h.astype(jnp.bfloat16), w2_ref[...],
                    preferred_element_type=jnp.float32)
        out_ref[...] = y + b2_ref[...]


def fold_params(params):
    """One-time prep (do NOT call per forward pass): fold eval-mode BatchNorm1d
    into Linear1, pad the class dim to a lane-dense multiple of 128, cast the
    weight matrices to bf16 (MXU-native)."""
    H = params["w1"].shape[0]
    C = params["w2"].shape[1]
    scale = params["gamma"] * jax.lax.rsqrt(params["var"] + _BN_EPS)    # (1, H)
    shift = params["beta"] - params["mean"] * scale                     # (1, H)
    w1 = (params["w1"] * scale).astype(jnp.bfloat16)                    # (H, H)
    b1 = (params["b1"] * scale + shift).astype(jnp.float32)             # (1, H)
    C_pad = _round_up(max(C, _LANE), _LANE)
    w2 = jnp.zeros((H, C_pad), jnp.float32).at[:, :C].set(params["w2"])
    w2 = w2.astype(jnp.bfloat16)                                        # (H, C_pad)
    b2 = jnp.zeros((1, C_pad), jnp.float32).at[:, :C].set(params["b2"])
    return dict(w1=w1, b1=b1, w2=w2, b2=b2, num_classes=C)


def _vmem_budget_bytes():
    """Physical VMEM minus headroom (generation-aware: 128 MiB v5e/v6e, 64 MiB v7x)."""
    cap = 64 << 20  # conservative fallback
    try:
        cap = int(getattr(pltpu.get_tpu_info(), "vmem_capacity_bytes", cap))
    except Exception:
        pass
    return max(cap - (8 << 20), 16 << 20)


def _choose_tiles(N, H, C_pad, row_tile, budget):
    """Pick (row tile TN, K slice TK) so resident weights + pipelined tiles fit."""
    invariant = H * 4 + H * C_pad * 2 + C_pad * 4        # b1 + w2 + b2 (1-buffered)

    def per_row(tk):  # bytes/batch row: x bufs (bf16) + out bufs (f32) + f32 acc
        return _X_BUFS * tk * 2 + _OUT_BUFS * C_pad * 4 + H * 4

    def rows_for(tk, w1_bufs):
        avail = budget - invariant - w1_bufs * tk * H * 2
        return avail // per_row(tk) if avail > 0 else 0

    want = max(_SUBLANE, min(row_tile, _round_up(N, _SUBLANE)))

    if rows_for(H, 1) >= min(want, 128):
        tk = H                                   # w1 fully resident, single-buffered
    else:
        # Stream double-buffered (TK, H) slices of w1; TK must divide H and be a
        # multiple of 128 so x blocks stay lane-aligned.
        tk = 0
        cand = _LANE
        while cand < H:
            if H % cand == 0 and rows_for(cand, 2) >= min(want, 128):
                tk = cand                        # largest fitting slice wins
            cand += _LANE
        if tk == 0:
            tk = _LANE if H % _LANE == 0 else H  # smallest legal slice

    w1_bufs = 1 if tk == H else 2
    tn = min(want, max(rows_for(tk, w1_bufs), _SUBLANE))
    tn = max(_SUBLANE, (tn // _SUBLANE) * _SUBLANE)      # (8,128) sublane rule
    return tn, tk


def classification_head(x, folded, *, row_tile=512, max_k_tile=None):
    """x: (N, H) float32 or bfloat16.  folded: output of fold_params().
    Returns (N, num_classes) float32."""
    N, H = x.shape
    C = folded["num_classes"]
    C_pad = folded["w2"].shape[1]

    # HBM-bound on the x stream for moderate H -> feed x as bf16 (accumulation
    # stays f32 inside the MXU via preferred_element_type).
    if x.dtype != jnp.bfloat16:
        x = x.astype(jnp.bfloat16)

    budget = _vmem_budget_bytes()
    tn, tk = _choose_tiles(N, H, C_pad, row_tile, budget)
    if (max_k_tile is not None and max_k_tile < tk
            and H % max_k_tile == 0 and max_k_tile % _LANE == 0):
        tk = max_k_tile                     # explicit K-tiling override (testing)

    grid_n = pl.cdiv(N, tn)                 # ragged final row tile: masked stores
    grid_k = H // tk
    w1_bufs = 1 if grid_k == 1 else 2       # invariant -> 1 buffer; streamed -> 2

    vmem_need = (
        w1_bufs * tk * H * 2                 # w1 (bf16)
        + H * 4 + H * C_pad * 2 + C_pad * 4  # b1, w2, b2 (single-buffered)
        + _X_BUFS * tn * tk * 2              # x tiles (bf16)
        + _OUT_BUFS * tn * C_pad * 4         # out tiles (f32)
        + tn * H * 4                         # f32 accumulator scratch
    )
    vmem_limit = int(max(min(vmem_need + (4 << 20), budget), min(32 << 20, budget)))

    out = pl.pallas_call(
        _head_kernel,
        out_shape=jax.ShapeDtypeStruct((N, C_pad), jnp.float32),
        grid=(grid_n, grid_k),
        in_specs=[
            pl.BlockSpec((tn, tk), lambda i, k: (i, k)),          # x (pipelined)
            pl.BlockSpec((tk, H), lambda i, k: (k, 0),
                         pipeline_mode=pl.Buffered(w1_bufs)),     # w1
            pl.BlockSpec((1, H), lambda i, k: (0, 0),
                         pipeline_mode=pl.Buffered(1)),           # b1 (invariant)
            pl.BlockSpec((H, C_pad), lambda i, k: (0, 0),
                         pipeline_mode=pl.Buffered(1)),           # w2 (invariant)
            pl.BlockSpec((1, C_pad), lambda i, k: (0, 0),
                         pipeline_mode=pl.Buffered(1)),           # b2 (invariant)
        ],
        out_specs=pl.BlockSpec((tn, C_pad), lambda i, k: (i, 0)),
        scratch_shapes=[pltpu.VMEM((tn, H), jnp.float32)],
        compiler_params=pltpu.CompilerParams(
            # Row tiles independent -> "parallel"; H reduction innermost "arbitrary".
            # TODO(synk): evaluate pltpu.CORE_PARALLEL on the row axis for v7x
            # 2-TC sharding once verified in xprof.
            dimension_semantics=("parallel", "arbitrary"),
            vmem_limit_bytes=vmem_limit,
        ),
    )(x, folded["w1"], folded["b1"], folded["w2"], folded["b2"])

    return out[:, :C]


def init_params(key, input_dim, output_dim):
    """Deterministic synthetic parameters matching the PyTorch module's shapes."""
    k1, k2, k3, k4 = jax.random.split(key, 4)
    # Linear weights stored as (in_dim, out_dim) = transpose of PyTorch's (out, in).
    w1 = jax.random.normal(k1, (input_dim, input_dim), jnp.float32) * 0.05
    b1 = jax.random.normal(k2, (1, input_dim), jnp.float32) * 0.01
    w2 = jax.random.normal(k3, (input_dim, output_dim), jnp.float32) * 0.05
    b2 = jax.random.normal(k4, (1, output_dim), jnp.float32) * 0.01
    # BatchNorm1d affine + running stats (perturbed from defaults so BN does work).
    gamma = jnp.ones((1, input_dim), jnp.float32) * 1.1
    beta = jnp.full((1, input_dim), 0.05, jnp.float32)
    mean = jnp.full((1, input_dim), 0.02, jnp.float32)
    var = jnp.ones((1, input_dim), jnp.float32) * 0.9
    return dict(w1=w1, b1=b1, gamma=gamma, beta=beta, mean=mean, var=var,
                w2=w2, b2=b2)


def classification_head_ref(x, p):
    """Pure-JAX f32 reference (Linear -> BN eval -> ReLU -> Linear)."""
    h = x @ p["w1"] + p["b1"]
    h = (h - p["mean"]) / jnp.sqrt(p["var"] + _BN_EPS) * p["gamma"] + p["beta"]
    h = jnp.maximum(h, 0.0)
    return h @ p["w2"] + p["b2"]


if __name__ == "__main__":
    key = jax.random.PRNGKey(0)
    kx, kp, kx2, kp2 = jax.random.split(key, 4)

    # Case 1: w1-resident path.  row_tile=16 forces a multi-step row grid with a
    # ragged final tile (50 = 3*16 + 2); C=5 exercises class-dim lane padding.
    N, H, C = 50, 128, 5
    x = jax.random.normal(kx, (N, H), jnp.float32)
    params = init_params(kp, H, C)
    folded = fold_params(params)
    out = jax.block_until_ready(classification_head(x, folded, row_tile=16))
    ref = classification_head_ref(x, params)
    assert out.shape == (N, C), out.shape
    # bf16 weights/activations in the matmuls (f32 accumulation) drift slightly
    # from the pure-f32 reference; tolerance set accordingly.
    assert jnp.allclose(out, ref, atol=5e-2, rtol=5e-2), (
        "case1 mismatch: max abs err = %e" % float(jnp.max(jnp.abs(out - ref))))

    # Case 2: K-tiled path (H=256 split into two streamed 128-wide w1 slices,
    # f32 accumulator across the K grid axis).
    N2, H2, C2 = 24, 256, 10
    x2 = jax.random.normal(kx2, (N2, H2), jnp.float32)
    params2 = init_params(kp2, H2, C2)
    folded2 = fold_params(params2)
    out2 = jax.block_until_ready(
        classification_head(x2, folded2, row_tile=16, max_k_tile=128))
    ref2 = classification_head_ref(x2, params2)
    assert out2.shape == (N2, C2), out2.shape
    assert jnp.allclose(out2, ref2, atol=5e-2, rtol=5e-2), (
        "case2 mismatch: max abs err = %e" % float(jnp.max(jnp.abs(out2 - ref2))))

    print("KERNEL_OK")
</pallas_src>

<mosaic_0001>
module attributes {stable_mosaic.version = 11 : i64} {
  func.func @_head_kernel(%arg0: i32, %arg1: i32, %arg2: memref<16x128xbf16, #tpu.memory_space<vmem>>, %arg3: memref<128x128xbf16, #tpu.memory_space<vmem>>, %arg4: memref<1x128xf32, #tpu.memory_space<vmem>>, %arg5: memref<128x128xbf16, #tpu.memory_space<vmem>>, %arg6: memref<1x128xf32, #tpu.memory_space<vmem>>, %arg7: memref<16x128xf32, #tpu.memory_space<vmem>>, %arg8: memref<16x128xf32, #tpu.memory_space<vmem>>) attributes {dimension_semantics = [#tpu.dimension_semantics<parallel>, #tpu.dimension_semantics<arbitrary>], iteration_bounds = array<i64: 4, 1>, scalar_prefetch = 0 : i64, scratch_operands = 1 : i64, tpu.core_type = #tpu.core_type<tc>, window_params = [{transform_indices = @transform_0, window_bounds = array<i64: 16, 128>}, {pipeline_mode = #tpu.pipeline_mode<synchronous>, transform_indices = @transform_1, window_bounds = array<i64: 128, 128>}, {pipeline_mode = #tpu.pipeline_mode<synchronous>, transform_indices = @transform_2, window_bounds = array<i64: 1, 128>}, {pipeline_mode = #tpu.pipeline_mode<synchronous>, transform_indices = @transform_3, window_bounds = array<i64: 128, 128>}, {pipeline_mode = #tpu.pipeline_mode<synchronous>, transform_indices = @transform_4, window_bounds = array<i64: 1, 128>}, {transform_indices = @transform_5, window_bounds = array<i64: 16, 128>}]} {
    %c0_i32 = arith.constant 0 : i32
    %0 = arith.cmpi eq, %arg1, %c0_i32 : i32
    %1 = arith.extui %0 : i1 to i32
    %c0_i32_0 = arith.constant 0 : i32
    %2 = arith.cmpi ne, %1, %c0_i32_0 : i32
    scf.if %2 {
      %cst_10 = arith.constant 0.000000e+00 : f32
      %12 = vector.broadcast %cst_10 : f32 to vector<16x128xf32>
      %c0_11 = arith.constant 0 : index
      %c0_12 = arith.constant 0 : index
      %13 = vector.load %arg8[%c0_11, %c0_12] : memref<16x128xf32, #tpu.memory_space<vmem>>, vector<16x128xf32>
      tpu.vector_store %arg8[%c0_11, %c0_12], %12 {strides = array<i32>} : memref<16x128xf32, #tpu.memory_space<vmem>>, vector<16x128xf32>,
    } else {
    }
    %c0 = arith.constant 0 : index
    %c0_1 = arith.constant 0 : index
    %3 = vector.load %arg8[%c0, %c0_1] : memref<16x128xf32, #tpu.memory_space<vmem>>, vector<16x128xf32>
    %c0_2 = arith.constant 0 : index
    %c0_3 = arith.constant 0 : index
    %4 = vector.load %arg2[%c0_2, %c0_3] : memref<16x128xbf16, #tpu.memory_space<vmem>>, vector<16x128xbf16>
    %c0_4 = arith.constant 0 : index
    %c0_5 = arith.constant 0 : index
    %5 = vector.load %arg3[%c0_4, %c0_5] : memref<128x128xbf16, #tpu.memory_space<vmem>>, vector<128x128xbf16>
    %cst = arith.constant dense<0.000000e+00> : vector<16x128xf32>
    %6 = tpu.matmul %4, %5, %cst {dimension_numbers = #tpu.dot_dimension_numbers<[1], [0], [0], [1], [0, 0, 1, 1], [], []>} : vector<16x128xbf16>, vector<128x128xbf16>, vector<16x128xf32> -> vector<16x128xf32>
    %7 = arith.addf %3, %6 : vector<16x128xf32>
    %c0_6 = arith.constant 0 : index
    %c0_7 = arith.constant 0 : index
    %8 = vector.load %arg8[%c0_6, %c0_7] : memref<16x128xf32, #tpu.memory_space<vmem>>, vector<16x128xf32>
    tpu.vector_store %arg8[%c0_6, %c0_7], %7 {strides = array<i32>} : memref<16x128xf32, #tpu.memory_space<vmem>>, vector<16x128xf32>,
    %c0_i32_8 = arith.constant 0 : i32
    %9 = arith.cmpi eq, %arg1, %c0_i32_8 : i32
    %10 = arith.extui %9 : i1 to i32
    %c0_i32_9 = arith.constant 0 : i32
    %11 = arith.cmpi ne, %10, %c0_i32_9 : i32
    scf.if %11 {
      %c0_10 = arith.constant 0 : index
      %c0_11 = arith.constant 0 : index
      %12 = vector.load %arg8[%c0_10, %c0_11] : memref<16x128xf32, #tpu.memory_space<vmem>>, vector<16x128xf32>
      %c0_12 = arith.constant 0 : index
      %c0_13 = arith.constant 0 : index
      %13 = vector.load %arg4[%c0_12, %c0_13] : memref<1x128xf32, #tpu.memory_space<vmem>>, vector<1x128xf32>
      %14 = vector.broadcast %13 : vector<1x128xf32> to vector<16x128xf32>
      %15 = arith.addf %12, %14 : vector<16x128xf32>
      %cst_14 = arith.constant 0.000000e+00 : f32
      %16 = vector.broadcast %cst_14 : f32 to vector<16x128xf32>
      %17 = arith.maximumf %15, %16 : vector<16x128xf32>
      %18 = arith.truncf %17 : vector<16x128xf32> to vector<16x128xbf16>
      %c0_15 = arith.constant 0 : index
      %c0_16 = arith.constant 0 : index
      %19 = vector.load %arg5[%c0_15, %c0_16] : memref<128x128xbf16, #tpu.memory_space<vmem>>, vector<128x128xbf16>
      %cst_17 = arith.constant dense<0.000000e+00> : vector<16x128xf32>
      %20 = tpu.matmul %18, %19, %cst_17 {dimension_numbers = #tpu.dot_dimension_numbers<[1], [0], [0], [1], [0, 0, 1, 1], [], []>} : vector<16x128xbf16>, vector<128x128xbf16>, vector<16x128xf32> -> vector<16x128xf32>
      %c0_18 = arith.constant 0 : index
      %c0_19 = arith.constant 0 : index
      %21 = vector.load %arg6[%c0_18, %c0_19] : memref<1x128xf32, #tpu.memory_space<vmem>>, vector<1x128xf32>
      %22 = vector.broadcast %21 : vector<1x128xf32> to vector<16x128xf32>
      %23 = arith.addf %20, %22 : vector<16x128xf32>
      %c0_20 = arith.constant 0 : index
      %c0_21 = arith.constant 0 : index
      %24 = vector.load %arg7[%c0_20, %c0_21] : memref<16x128xf32, #tpu.memory_space<vmem>>, vector<16x128xf32>
      tpu.vector_store %arg7[%c0_20, %c0_21], %23 {strides = array<i32>} : memref<16x128xf32, #tpu.memory_space<vmem>>, vector<16x128xf32>,
    } else {
    }
    return
  }
  func.func @transform_0(%arg0: i32, %arg1: i32) -> (i32, i32) {
    %c0_i32 = arith.constant 0 : i32
    return %arg0, %arg1 : i32, i32
  }
  func.func @transform_1(%arg0: i32, %arg1: i32) -> (i32, i32) {
    %c0_i32 = arith.constant 0 : i32
    %c0_i32_0 = arith.constant 0 : i32
    return %arg1, %c0_i32 : i32, i32
  }
  func.func @transform_2(%arg0: i32, %arg1: i32) -> (i32, i32) {
    %c0_i32 = arith.constant 0 : i32
    %c0_i32_0 = arith.constant 0 : i32
    %c0_i32_1 = arith.constant 0 : i32
    return %c0_i32, %c0_i32_0 : i32, i32
  }
  func.func @transform_3(%arg0: i32, %arg1: i32) -> (i32, i32) {
    %c0_i32 = arith.constant 0 : i32
    %c0_i32_0 = arith.constant 0 : i32
    %c0_i32_1 = arith.constant 0 : i32
    return %c0_i32, %c0_i32_0 : i32, i32
  }
  func.func @transform_4(%arg0: i32, %arg1: i32) -> (i32, i32) {
    %c0_i32 = arith.constant 0 : i32
    %c0_i32_0 = arith.constant 0 : i32
    %c0_i32_1 = arith.constant 0 : i32
    return %c0_i32, %c0_i32_0 : i32, i32
  }
  func.func @transform_5(%arg0: i32, %arg1: i32) -> (i32, i32) {
    %c0_i32 = arith.constant 0 : i32
    %c0_i32_0 = arith.constant 0 : i32
    return %arg0, %c0_i32 : i32, i32
  }
}

</mosaic_0001>

<llo_original>
// kernel: tpu_custom_call.1
$region0: #{tpu_custom_call.1}
  #allocation0 [shape = 'u32[]', space=smem, size = 0x4, offset = 0x4, fixed_abs, tag = 'smem constant byte address 0x4 - core index']
  #allocation1 [shape = 'u32[144,128]{1,0:T(1,128)}', space=vmem, size = 0x12000, scoped, tag = 'internal scratch']
  #allocation2 [shape = 'f32[16,128]{1,0:T(8,128)}', space=vmem, size = 0x2000, scoped, tag = 'scratch operand']
  %s0 = inlined_call_operand.hbm [shape: bf16[50,128], index: 0, kind: input, shape index: {}]
  %s1 = inlined_call_operand.hbm [shape: bf16[128,128], index: 1, kind: input, shape index: {}]
  %s2 = inlined_call_operand.vmem [shape: f32[1,128], index: 2, kind: input, shape index: {}]
  %s3 = inlined_call_operand.hbm [shape: bf16[128,128], index: 3, kind: input, shape index: {}]
  %s4 = inlined_call_operand.vmem [shape: f32[1,128], index: 4, kind: input, shape index: {}]
  %s5 = inlined_call_operand.hbm [shape: f32[50,128], index: 5, kind: output, shape index: {}]
  %s6 = sld [smem:[#allocation0]]
  $region73: #{tpu_custom_call.1} parent=0
    _
  %s8 = ssub.s32 1, %s6
  %s9 = scalar_select 0, %s8, %s6
  $region1: #{tpu_custom_call.1} parent=0
    #allocation3 [shape = 'u8[8192]{0}', space=vmem, size = 0x2000, scoped, tag = 'input window, operand 0']
    #allocation4 [shape = 's32[2]{0}', space=sflag, size = 0x8, scoped, tag = 'scoped memory for tpu_custom_call.1']
    #allocation5 [shape = 's32[2]{0}', space=sflag, size = 0x8, scoped, tag = 'scoped memory for tpu_custom_call.1']
    #allocation6 [shape = 'u8[32768]{0}', space=vmem, size = 0x8000, scoped, tag = 'input window, operand 1, single buffered']
    #allocation7 [shape = 's32[1]{0}', space=sflag, size = 0x4, scoped, tag = 'scoped memory for tpu_custom_call.1']
    #allocation8 [shape = 'u8[32768]{0}', space=vmem, size = 0x8000, scoped, tag = 'input window, operand 3, single buffered']
    #allocation9 [shape = 'u8[16384]{0}', space=vmem, size = 0x4000, scoped, tag = 'output window, operand 0']
    %10 = vsyncpa [#allocation4], 0
    %s11 = scalar_lea.sflag [#allocation4], 1
    %12 = vsyncpa %s11, 0
    %13 = vsyncpa [#allocation7], 0
    %14 = vsyncpa [#allocation5], 0
    %s15 = scalar_lea.sflag [#allocation5], 1
    %16 = vsyncpa %s15, 0
    loop: start=0, step=1, limit=6
    $region2: #{tpu_custom_call.1} parent=1 // loop_pre_header
      _
    $region3: #{tpu_custom_call.1} parent=1 // loop_header
      %s18 = sphi 0, %s22
      %p19 = scmp.ge.s32.totalorder %s18, 6
      %s25 = sphi 0, %s37
      %s26 = sphi 0, %s33
      %s27 = sphi 0, %s25
      %s28 = sphi 0, %s26
      %s29 = sphi 0, %s27
      %s30 = sphi 0, %s28
      %s42 = sphi 0, %s44
      %s45 = sphi 0, %s42
      %s46 = sphi 0, %s45
      %s62 = sphi 0, %s46
      %s68 = sphi 0, %s70
      %s71 = sphi 0, %s68
      %s72 = sphi 0, %s71
      %s88 = sphi 0, %s72
      %s92 = sphi 0, %s92
      %s94 = sphi 0, %s92
      %s95 = sphi 0, %s94
      %s109 = sphi 0, %s95
      %s113 = sphi 0, %s113
      %s115 = sphi 0, %s113
      %s116 = sphi 0, %s115
      %s130 = sphi 0, %s116
      %s134 = sphi 0, %s134
      %s136 = sphi 0, %s134
      %s137 = sphi 0, %s136
      %s151 = sphi 0, %s137
      %s157 = sphi 0, %s159
      %s160 = sphi 0, %s157
      %s161 = sphi 0, %s160
      %s177 = sphi 0, %s161
    $region4: #{tpu_custom_call.1} parent=1 // loop_header_branch
      %21 = sbr.rel (%p19) target = $region8
    $region5: #{tpu_custom_call.1} parent=1 // loop_body
      %s23 = ssub.s32 %s18, 1
      %s24 = ssub.s32 %s18, 2
      %s31 = sadd.s32 1, %s26
      %p32 = scmp.ge.s32.totalorder %s31, 1
      %s33 = scalar_select %p32, 0, %s31
      %s34 = sadd.s32 1, %s25
      %s35 = scalar_select %p32, %s34, %s25
      %p36 = scmp.ge.s32.totalorder %s35, 4
      %s37 = scalar_select %p36, 0, %s35
      %s38 = ssub.s32 %s25, %s37
      %s39 = ssub.s32 %s26, %s33
      %s40 = sor.u32 %s38, %s39
      %p41 = scmp.eq.s32.totalorder %s40, 0
      %s43 = sadd.s32 %s42, 1
      %s44 = scalar_select %p41, %s42, %s43
      %p47 = pneg %p41
      %p48 = scmp.eq.s32.totalorder %s18, 3
      %p49 = por %p47, %p48
      %p50 = scmp.ne.s32.totalorder %s42, %s45
      %p51 = scmp.eq.s32.totalorder %s18, 0
      %p52 = por %p50, %p51
      %p53 = scmp.ne.s32.totalorder %s42, %s45
      %p54 = scmp.eq.s32.totalorder %s23, 3
      %p55 = por %p53, %p54
      %p56 = scmp.ne.s32.totalorder %s45, %s46
      %p57 = scmp.eq.s32.totalorder %s23, 0
      %p58 = por %p56, %p57
      %p59 = scmp.ne.s32.totalorder %s45, %s46
      %p60 = scmp.eq.s32.totalorder %s24, 3
      %p61 = por %p59, %p60
      %p63 = scmp.ne.s32.totalorder %s46, %s62
      %p64 = scmp.eq.s32.totalorder %s24, 0
      %p65 = por %p63, %p64
      %s66 = ssub.s32 %s26, %s33
      %p67 = scmp.eq.s32.totalorder %s66, 0
      %s69 = sadd.s32 %s68, 1
      %s70 = scalar_select %p67, %s68, %s69
      %p73 = pneg %p67
      %p74 = scmp.eq.s32.totalorder %s18, 3
      %p75 = por %p73, %p74
      %p76 = scmp.ne.s32.totalorder %s68, %s71
      %p77 = scmp.eq.s32.totalorder %s18, 0
      %p78 = por %p76, %p77
      %p79 = scmp.ne.s32.totalorder %s68, %s71
      %p80 = scmp.eq.s32.totalorder %s23, 3
      %p81 = por %p79, %p80
      %p82 = scmp.ne.s32.totalorder %s71, %s72
      %p83 = scmp.eq.s32.totalorder %s23, 0
      %p84 = por %p82, %p83
      %p85 = scmp.ne.s32.totalorder %s71, %s72
      %p86 = scmp.eq.s32.totalorder %s24, 3
      %p87 = por %p85, %p86
      %p89 = scmp.ne.s32.totalorder %s72, %s88
      %p90 = scmp.eq.s32.totalorder %s24, 0
      %p91 = por %p89, %p90
      %s93 = sadd.s32 %s92, 1
      %p96 = scmp.eq.s32.totalorder %s18, 3
      %p97 = scmp.ne.s32.totalorder %s92, %s94
      %p98 = scmp.eq.s32.totalorder %s18, 0
      %p99 = por %p97, %p98
      %p100 = scmp.ne.s32.totalorder %s92, %s94
      %p101 = scmp.eq.s32.totalorder %s23, 3
      %p102 = por %p100, %p101
      %p103 = scmp.ne.s32.totalorder %s94, %s95
      %p104 = scmp.eq.s32.totalorder %s23, 0
      %p105 = por %p103, %p104
      %p106 = scmp.ne.s32.totalorder %s94, %s95
      %p107 = scmp.eq.s32.totalorder %s24, 3
      %p108 = por %p106, %p107
      %p110 = scmp.ne.s32.totalorder %s95, %s109
      %p111 = scmp.eq.s32.totalorder %s24, 0
      %p112 = por %p110, %p111
      %s114 = sadd.s32 %s113, 1
      %p117 = scmp.eq.s32.totalorder %s18, 3
      %p118 = scmp.ne.s32.totalorder %s113, %s115
      %p119 = scmp.eq.s32.totalorder %s18, 0
      %p120 = por %p118, %p119
      %p121 = scmp.ne.s32.totalorder %s113, %s115
      %p122 = scmp.eq.s32.totalorder %s23, 3
      %p123 = por %p121, %p122
      %p124 = scmp.ne.s32.totalorder %s115, %s116
      %p125 = scmp.eq.s32.totalorder %s23, 0
      %p126 = por %p124, %p125
      %p127 = scmp.ne.s32.totalorder %s115, %s116
      %p128 = scmp.eq.s32.totalorder %s24, 3
      %p129 = por %p127, %p128
      %p131 = scmp.ne.s32.totalorder %s116, %s130
      %p132 = scmp.eq.s32.totalorder %s24, 0
      %p133 = por %p131, %p132
      %s135 = sadd.s32 %s134, 1
      %p138 = scmp.eq.s32.totalorder %s18, 3
      %p139 = scmp.ne.s32.totalorder %s134, %s136
      %p140 = scmp.eq.s32.totalorder %s18, 0
      %p141 = por %p139, %p140
      %p142 = scmp.ne.s32.totalorder %s134, %s136
      %p143 = scmp.eq.s32.totalorder %s23, 3
      %p144 = por %p142, %p143
      %p145 = scmp.ne.s32.totalorder %s136, %s137
      %p146 = scmp.eq.s32.totalorder %s23, 0
      %p147 = por %p145, %p146
      %p148 = scmp.ne.s32.totalorder %s136, %s137
      %p149 = scmp.eq.s32.totalorder %s24, 3
      %p150 = por %p148, %p149
      %p152 = scmp.ne.s32.totalorder %s137, %s151
      %p153 = scmp.eq.s32.totalorder %s24, 0
      %p154 = por %p152, %p153
      %s155 = ssub.s32 %s25, %s37
      %p156 = scmp.eq.s32.totalorder %s155, 0
      %s158 = sadd.s32 %s157, 1
      %s159 = scalar_select %p156, %s157, %s158
      %p162 = pneg %p156
      %p163 = scmp.eq.s32.totalorder %s18, 3
      %p164 = por %p162, %p163
      %p165 = scmp.ne.s32.totalorder %s157, %s160
      %p166 = scmp.eq.s32.totalorder %s18, 0
      %p167 = por %p165, %p166
      %p168 = scmp.ne.s32.totalorder %s157, %s160
      %p169 = scmp.eq.s32.totalorder %s23, 3
      %p170 = por %p168, %p169
      %p171 = scmp.ne.s32.totalorder %s160, %s161
      %p172 = scmp.eq.s32.totalorder %s23, 0
      %p173 = por %p171, %p172
      %p174 = scmp.ne.s32.totalorder %s160, %s161
      %p175 = scmp.eq.s32.totalorder %s24, 3
      %p176 = por %p174, %p175
      %p178 = scmp.ne.s32.totalorder %s161, %s177
      %p179 = scmp.eq.s32.totalorder %s24, 0
      %p180 = por %p178, %p179
      %p181 = scmp.le.s32.totalorder 1, %s18
      %p182 = scmp.lt.s32.totalorder %s18, 5
      %p183 = pnand %p181, %p182
      %p184 = pneg %p183
      // Predicated region
      $region9: #{tpu_custom_call.1} parent=5 // pred_check
        _
      $region10: #{tpu_custom_call.1} parent=5 // pred_check_branch
        %186 = sbr.rel (%p183) target = $region12
      $region11: #{tpu_custom_call.1} parent=5 // pred_region
        %s187 = ssub.s32 %s18, 1
        // Predicated region
        $region13: #{tpu_custom_call.1} parent=11 // pred_check
          %p188 = pneg %p84
        $region14: #{tpu_custom_call.1} parent=11 // pred_check_branch
          %190 = sbr.rel (%p188) target = $region16
        $region15: #{tpu_custom_call.1} parent=11 // pred_region
          %s191 = smul.u32 16, %s28
          %s193 = ssub.s32 1024, 1024
          %194 = vsyncadd [#allocation7], %s193
          %s195 = smul.addr %s191, 64
          %s196 = scalar_lea.hbm %s1, %s195
          %s197 = sshll.u32 [#allocation6], 4
          %s198 = int_to_ptr.vmem [resolvable:$true] %s197
          %203 = dma.hbm_to_vmem [thread:$0]  %s196, 1024, %s198, [#allocation7], 64, 64, 4
        $region16: #{tpu_custom_call.1} parent=11 // pred_fallthru
          _
        // Predicated region
        $region17: #{tpu_custom_call.1} parent=11 // pred_check
          %p204 = pneg %p105
        $region18: #{tpu_custom_call.1} parent=11 // pred_check_branch
          %206 = sbr.rel (%p204) target = $region20
        $region19: #{tpu_custom_call.1} parent=11 // pred_region
          _
        $region20: #{tpu_custom_call.1} parent=11 // pred_fallthru
          _
        // Predicated region
        $region21: #{tpu_custom_call.1} parent=11 // pred_check
          %p207 = pneg %p126
        $region22: #{tpu_custom_call.1} parent=11 // pred_check_branch
          %209 = sbr.rel (%p207) target = $region24
        $region23: #{tpu_custom_call.1} parent=11 // pred_region
          %s211 = ssub.s32 1024, 1024
          %212 = vsyncadd [#allocation7], %s211
          %s213 = sshll.u32 [#allocation8], 4
          %s214 = int_to_ptr.vmem [resolvable:$true] %s213
          %219 = dma.hbm_to_vmem [thread:$0]  %s3, 1024, %s214, [#allocation7], 64, 64, 4
        $region24: #{tpu_custom_call.1} parent=11 // pred_fallthru
          _
        // Predicated region
        $region25: #{tpu_custom_call.1} parent=11 // pred_check
          %p220 = pneg %p147
        $region26: #{tpu_custom_call.1} parent=11 // pred_check_branch
          %222 = sbr.rel (%p220) target = $region28
        $region27: #{tpu_custom_call.1} parent=11 // pred_region
          _
        $region28: #{tpu_custom_call.1} parent=11 // pred_fallthru
          _
      $region12: #{tpu_custom_call.1} parent=5 // pred_fallthru
        _
      %p223 = scmp.lt.s32.totalorder %s18, 4
      // Predicated region
      $region29: #{tpu_custom_call.1} parent=5 // pred_check
        %p224 = pneg %p223
      $region30: #{tpu_custom_call.1} parent=5 // pred_check_branch
        %226 = sbr.rel (%p224) target = $region32
      $region31: #{tpu_custom_call.1} parent=5 // pred_region
        // Predicated region
        $region33: #{tpu_custom_call.1} parent=31 // pred_check
          %p227 = pneg %p52
        $region34: #{tpu_custom_call.1} parent=31 // pred_check_branch
          %229 = sbr.rel (%p227) target = $region36
        $region35: #{tpu_custom_call.1} parent=31 // pred_region
          %s230 = sand.u32 %s42, 1
          %s231 = scalar_lea.sflag [#allocation4], %s230
          %s232 = sand.u32 %s42, 1
          %s233 = smul.addr %s232, 8
          %s234 = scalar_lea.vmem [#allocation3], %s233
          %s235 = smul.u32 2, %s25
          %s236 = ssub.s32 7, %s235
          %p237 = scmp.lt.s32.totalorder %s236, 2
          %s238 = scalar_select %p237, %s236, 2
          %s239 = smul.u32 64, %s238
          %s241 = ssub.s32 128, %s239
          %242 = vsyncadd %s231, %s241
          %p243 = scmp.ne.s32.totalorder 0, %s239
          %s244 = sadd.s32 %s26, %s235
          %s245 = smul.addr %s244, 64
          %s246 = scalar_lea.hbm %s0, %s245
          %s247 = smul.u32 4, %s238
          %s248 = sshll.u32 %s234, 4
          %s249 = int_to_ptr.vmem [resolvable:$true] %s248
          %s250 = sshll.u32 %s247, 4
          %254 = dma.hbm_to_vmem [thread:$0]  (%p243), %s246, %s250, %s249, %s231, 64, 64, 4
        $region36: #{tpu_custom_call.1} parent=31 // pred_fallthru
          _
      $region32: #{tpu_custom_call.1} parent=5 // pred_fallthru
        _
      %p255 = scmp.le.s32.totalorder 1, %s18
      %p256 = scmp.lt.s32.totalorder %s18, 5
      %p257 = pnand %p255, %p256
      %p258 = pneg %p257
      // Predicated region
      $region37: #{tpu_custom_call.1} parent=5 // pred_check
        _
      $region38: #{tpu_custom_call.1} parent=5 // pred_check_branch
        %260 = sbr.rel (%p257) target = $region40
      $region39: #{tpu_custom_call.1} parent=5 // pred_region
        %s261 = ssub.s32 %s18, 1
        %s262 = sand.u32 %s45, 1
        %s263 = scalar_lea.sflag [#allocation4], %s262
        %s264 = sand.u32 %s45, 1
        %s265 = smul.addr %s264, 8
        %s266 = scalar_lea.vmem [#allocation3], %s265
        // Predicated region
        $region41: #{tpu_custom_call.1} parent=39 // pred_check
          %p267 = pneg %p58
        $region42: #{tpu_custom_call.1} parent=39 // pred_check_branch
          %269 = sbr.rel (%p267) target = $region44
        $region43: #{tpu_custom_call.1} parent=39 // pred_region
          %270 = dma.done %s263, 128
        $region44: #{tpu_custom_call.1} parent=39 // pred_fallthru
          _
        // Predicated region
        $region45: #{tpu_custom_call.1} parent=39 // pred_check
          %p271 = pneg %p84
        $region46: #{tpu_custom_call.1} parent=39 // pred_check_branch
          %273 = sbr.rel (%p271) target = $region48
        $region47: #{tpu_custom_call.1} parent=39 // pred_region
          %274 = dma.done [#allocation7], 1024
        $region48: #{tpu_custom_call.1} parent=39 // pred_fallthru
          _
        // Predicated region
        $region49: #{tpu_custom_call.1} parent=39 // pred_check
          %p275 = pneg %p126
        $region50: #{tpu_custom_call.1} parent=39 // pred_check_branch
          %277 = sbr.rel (%p275) target = $region52
        $region51: #{tpu_custom_call.1} parent=39 // pred_region
          %278 = dma.done [#allocation7], 1024
        $region52: #{tpu_custom_call.1} parent=39 // pred_fallthru
          _
        %s279 = sand.u32 %s45, 1
        %s280 = scalar_lea.sflag [#allocation4], %s279
        %s281 = sand.u32 %s45, 1
        %s282 = smul.addr %s281, 8
        %s283 = scalar_lea.vmem [#allocation3], %s282
        %p284 = pneg %p58
        %p285 = pneg %p55
        %p286 = pneg %p84
        %p287 = pneg %p81
        %p288 = pneg %p105
        %p289 = pneg %p102
        %p290 = pneg %p126
        %p291 = pneg %p123
        %p292 = pneg %p147
        %p293 = pneg %p144
        %p294 = pneg %p173
        %p295 = pneg %p170
        %s296 = sand.u32 %s160, 1
        %s297 = scalar_lea.sflag [#allocation5], %s296
        %s298 = sand.u32 %s160, 1
        %s299 = smul.addr %s298, 16
        %s300 = scalar_lea.vmem [#allocation9], %s299
        %s301 = smul.u32 2, %s27
        %s302 = ssub.s32 7, %s301
        %p303 = scmp.lt.s32.totalorder %s302, 2
        %s304 = scalar_select %p303, %s302, 2
        %s305 = smul.u32 64, %s304
        %s306 = smul.u32 16, %s28
        %s307 = smul.u32 2, %s27
        %s308 = ssub.s32 7, %s307
        %p309 = scmp.lt.s32.totalorder %s308, 2
        %s310 = scalar_select %p309, %s308, 2
        %s311 = smul.u32 128, %s310
        %p313 = scmp.eq.s32.totalorder %s28, 0
        // Predicated region
        $region53: #{tpu_custom_call.1} parent=39 // pred_check
          %p314 = pneg %p313
        $region54: #{tpu_custom_call.1} parent=39 // pred_check_branch
          %316 = sbr.rel (%p314) target = $region56
        $region55: #{tpu_custom_call.1} parent=39 // pred_region
          %317 = vst [vmem:[#allocation2] sm:$0xff] 0.0
          %318 = vst [vmem:[#allocation2 + $0x8] sm:$0xff] 0.0
        $region56: #{tpu_custom_call.1} parent=39 // pred_fallthru
          _
        %v319 = vld [vmem:[#allocation2] sm:$0xff]
        %v320 = vld [vmem:[#allocation2 + $0x8] sm:$0xff]
        %v321 = vld [vmem:[%s266] sm:$0xf]
        %v322 = vld [vmem:[%s266 + $0x4] sm:$0xf]
        %v323 = vld [vmem:[#allocation6] sm:$0xf]
        %v324 = vld [vmem:[#allocation6 + $0x4] sm:$0xf]
        %v325 = vld [vmem:[#allocation6 + $0x8] sm:$0xf]
        %v326 = vld [vmem:[#allocation6 + $0xc] sm:$0xf]
        %v327 = vld [vmem:[#allocation6 + $0x10] sm:$0xf]
        %v328 = vld [vmem:[#allocation6 + $0x14] sm:$0xf]
        %v329 = vld [vmem:[#allocation6 + $0x18] sm:$0xf]
        %v330 = vld [vmem:[#allocation6 + $0x1c] sm:$0xf]
        %v331 = vld [vmem:[#allocation6 + $0x20] sm:$0xf]
        %v332 = vld [vmem:[#allocation6 + $0x24] sm:$0xf]
        %v333 = vld [vmem:[#allocation6 + $0x28] sm:$0xf]
        %v334 = vld [vmem:[#allocation6 + $0x2c] sm:$0xf]
        %v335 = vld [vmem:[#allocation6 + $0x30] sm:$0xf]
        %v336 = vld [vmem:[#allocation6 + $0x34] sm:$0xf]
        %v337 = vld [vmem:[#allocation6 + $0x38] sm:$0xf]
        %v338 = vld [vmem:[#allocation6 + $0x3c] sm:$0xf]
        %v341 = vunpack.c.l.b16 %v321
        %v342 = vunpack.c.l.b16 %v322
        %v343 = vpack.c.b16 %v342, %v341
        %v361 = vunpack.c.l.b16 %v323
        %v362 = vunpack.c.l.b16 %v324
        %v363 = vunpack.c.l.b16 %v325
        %v364 = vunpack.c.l.b16 %v326
        %v365 = vunpack.c.l.b16 %v327
        %v366 = vunpack.c.l.b16 %v328
        %v367 = vunpack.c.l.b16 %v329
        %v368 = vunpack.c.l.b16 %v330
        %v369 = vunpack.c.l.b16 %v331
        %v370 = vunpack.c.l.b16 %v332
        %v371 = vunpack.c.l.b16 %v333
        %v372 = vunpack.c.l.b16 %v334
        %v373 = vunpack.c.l.b16 %v335
        %v374 = vunpack.c.l.b16 %v336
        %v375 = vunpack.c.l.b16 %v337
        %v376 = vunpack.c.l.b16 %v338
        %v377 = vpack.c.b16 %v362, %v361
        %v378 = vpack.c.b16 %v364, %v363
        %v379 = vpack.c.b16 %v366, %v365
        %v380 = vpack.c.b16 %v368, %v367
        %v381 = vpack.c.b16 %v370, %v369
        %v382 = vpack.c.b16 %v372, %v371
        %v383 = vpack.c.b16 %v374, %v373
        %v384 = vpack.c.b16 %v376, %v375
        %393 = vmatprep.subr.bf16.mxu0 0
        %394 = vmatpush1.bf16.msra.mxu0 %v384
        %395 = vmatprep.subr.bf16.mxu0 0
        %396 = vmatpush1.bf16.msra.mxu0 %v383
        %397 = vmatprep.subr.bf16.mxu0 0
        %398 = vmatpush1.bf16.msra.mxu0 %v382
        %399 = vmatprep.subr.bf16.mxu0 0
        %400 = vmatpush1.bf16.msra.mxu0 %v381
        %401 = vmatprep.subr.bf16.mxu0 0
        %402 = vmatpush1.bf16.msra.mxu0 %v380
        %403 = vmatprep.subr.bf16.mxu0 0
        %404 = vmatpush1.bf16.msra.mxu0 %v379
        %405 = vmatprep.subr.bf16.mxu0 0
        %406 = vmatpush1.bf16.msra.mxu0 %v378
        %407 = vmatprep.subr.bf16.mxu0 0
        %408 = vmatpush1.bf16.msra.mxu0 %v377
        %409 = vmatprep.subr.bf16.mxu0 0
        %410 = vmatpush2.bf16.msra.mxu0 0
        %411 = vmatprep.subr.bf16.mxu0 0
        %412 = vmatpush2.bf16.msra.mxu0 0
        %413 = vmatprep.subr.bf16.mxu0 0
        %414 = vmatpush2.bf16.msra.mxu0 0
        %415 = vmatprep.subr.bf16.mxu0 0
        %416 = vmatpush2.bf16.msra.mxu0 0
        %417 = vmatprep.subr.bf16.mxu0 0
        %418 = vmatpush2.bf16.msra.mxu0 0
        %419 = vmatprep.subr.bf16.mxu0 0
        %420 = vmatpush2.bf16.msra.mxu0 0
        %421 = vmatprep.subr.bf16.mxu0 0
        %422 = vmatpush2.bf16.msra.mxu0 0
        %423 = vmatprep.subr.bf16.mxu0 0
        %424 = vmatpush2.bf16.msra.mxu0 0
        %425 = vmatprep.mubr.bf16.mxu0 0
        %426 = vmatmul.mubr.bf16.gmra.mxu0 %v343
        %v427 = vpop.f32.mrf.mxu0
        %v428 = vadd.f32 0.0, %v427
        %v429 = vpop.f32.mrf.mxu0
        %v430 = vpop.f32.mrf.mxu0
        %v431 = vadd.f32 0.0, %v430
        %v432 = vpop.f32.mrf.mxu0
        %433 = vdwg.mxu0
        %v434 = vadd.f32 %v319, %v428
        %v435 = vadd.f32 %v320, %v431
        %436 = vst [vmem:[#allocation2] sm:$0xff] %v434
        %437 = vst [vmem:[#allocation2 + $0x8] sm:$0xff] %v435
        // Predicated region
        $region57: #{tpu_custom_call.1} parent=39 // pred_check
          %p438 = pneg %p313
        $region58: #{tpu_custom_call.1} parent=39 // pred_check_branch
          %440 = sbr.rel (%p438) target = $region60
        $region59: #{tpu_custom_call.1} parent=39 // pred_region
          %v441 = vld [vmem:[#allocation2] sm:$0xff]
          %v442 = vld [vmem:[#allocation2 + $0x8] sm:$0xff]
          %v443 = vld [vmem:[%s2] sm:$0x1]
          %v445 = vlaneseq
          %v446 = vshrl.u32 %v445, 7
          %v447 = vsub.s32 0, %v446
          %v448 = vrot.slane %v443, %v447
          %v450 = vadd.f32 %v441, %v448
          %v451 = vadd.f32 %v442, %v448
          %v452 = vmax.f32 %v450, 0.0
          %v453 = vmax.f32 %v451, 0.0
          %v454 = vpack.c.bf16 %v453, %v452
          %v455 = vld [vmem:[#allocation8] sm:$0xf]
          %v456 = vld [vmem:[#allocation8 + $0x4] sm:$0xf]
          %v457 = vld [vmem:[#allocation8 + $0x8] sm:$0xf]
          %v458 = vld [vmem:[#allocation8 + $0xc] sm:$0xf]
          %v459 = vld [vmem:[#allocation8 + $0x10] sm:$0xf]
          %v460 = vld [vmem:[#allocation8 + $0x14] sm:$0xf]
          %v461 = vld [vmem:[#allocation8 + $0x18] sm:$0xf]
          %v462 = vld [vmem:[#allocation8 + $0x1c] sm:$0xf]
          %v463 = vld [vmem:[#allocation8 + $0x20] sm:$0xf]
          %v464 = vld [vmem:[#allocation8 + $0x24] sm:$0xf]
          %v465 = vld [vmem:[#allocation8 + $0x28] sm:$0xf]
          %v466 = vld [vmem:[#allocation8 + $0x2c] sm:$0xf]
          %v467 = vld [vmem:[#allocation8 + $0x30] sm:$0xf]
          %v468 = vld [vmem:[#allocation8 + $0x34] sm:$0xf]
          %v469 = vld [vmem:[#allocation8 + $0x38] sm:$0xf]
          %v470 = vld [vmem:[#allocation8 + $0x3c] sm:$0xf]
          %v471 = vld [vmem:[%s4] sm:$0x1]
          %v473 = vlaneseq
          %v474 = vshrl.u32 %v473, 7
          %v475 = vsub.s32 0, %v474
          %v476 = vrot.slane %v471, %v475
          %v494 = vunpack.c.l.b16 %v455
          %v495 = vunpack.c.l.b16 %v456
          %v496 = vunpack.c.l.b16 %v457
          %v497 = vunpack.c.l.b16 %v458
          %v498 = vunpack.c.l.b16 %v459
          %v499 = vunpack.c.l.b16 %v460
          %v500 = vunpack.c.l.b16 %v461
          %v501 = vunpack.c.l.b16 %v462
          %v502 = vunpack.c.l.b16 %v463
          %v503 = vunpack.c.l.b16 %v464
          %v504 = vunpack.c.l.b16 %v465
          %v505 = vunpack.c.l.b16 %v466
          %v506 = vunpack.c.l.b16 %v467
          %v507 = vunpack.c.l.b16 %v468
          %v508 = vunpack.c.l.b16 %v469
          %v509 = vunpack.c.l.b16 %v470
          %v510 = vpack.c.b16 %v495, %v494
          %v511 = vpack.c.b16 %v497, %v496
          %v512 = vpack.c.b16 %v499, %v498
          %v513 = vpack.c.b16 %v501, %v500
          %v514 = vpack.c.b16 %v503, %v502
          %v515 = vpack.c.b16 %v505, %v504
          %v516 = vpack.c.b16 %v507, %v506
          %v517 = vpack.c.b16 %v509, %v508
          %526 = vmatprep.subr.bf16.mxu0 0
          %527 = vmatpush1.bf16.msra.mxu0 %v517
          %528 = vmatprep.subr.bf16.mxu0 0
          %529 = vmatpush1.bf16.msra.mxu0 %v516
          %530 = vmatprep.subr.bf16.mxu0 0
          %531 = vmatpush1.bf16.msra.mxu0 %v515
          %532 = vmatprep.subr.bf16.mxu0 0
          %533 = vmatpush1.bf16.msra.mxu0 %v514
          %534 = vmatprep.subr.bf16.mxu0 0
          %535 = vmatpush1.bf16.msra.mxu0 %v513
          %536 = vmatprep.subr.bf16.mxu0 0
          %537 = vmatpush1.bf16.msra.mxu0 %v512
          %538 = vmatprep.subr.bf16.mxu0 0
          %539 = vmatpush1.bf16.msra.mxu0 %v511
          %540 = vmatprep.subr.bf16.mxu0 0
          %541 = vmatpush1.bf16.msra.mxu0 %v510
          %542 = vmatprep.subr.bf16.mxu0 0
          %543 = vmatpush2.bf16.msra.mxu0 0
          %544 = vmatprep.subr.bf16.mxu0 0
          %545 = vmatpush2.bf16.msra.mxu0 0
          %546 = vmatprep.subr.bf16.mxu0 0
          %547 = vmatpush2.bf16.msra.mxu0 0
          %548 = vmatprep.subr.bf16.mxu0 0
          %549 = vmatpush2.bf16.msra.mxu0 0
          %550 = vmatprep.subr.bf16.mxu0 0
          %551 = vmatpush2.bf16.msra.mxu0 0
          %552 = vmatprep.subr.bf16.mxu0 0
          %553 = vmatpush2.bf16.msra.mxu0 0
          %554 = vmatprep.subr.bf16.mxu0 0
          %555 = vmatpush2.bf16.msra.mxu0 0
          %556 = vmatprep.subr.bf16.mxu0 0
          %557 = vmatpush2.bf16.msra.mxu0 0
          %558 = vmatprep.mubr.bf16.mxu0 0
          %559 = vmatmul.mubr.bf16.gmra.mxu0 %v454
          %v560 = vpop.f32.mrf.mxu0
          %v561 = vadd.f32 %v476, %v560
          %v562 = vpop.f32.mrf.mxu0
          %v563 = vpop.f32.mrf.mxu0
          %v564 = vadd.f32 %v476, %v563
          %v565 = vpop.f32.mrf.mxu0
          %566 = vdwg.mxu0
          %567 = vst [vmem:[%s300] sm:$0xff] %v561
          %568 = vst [vmem:[%s300 + $0x8] sm:$0xff] %v564
        $region60: #{tpu_custom_call.1} parent=39 // pred_fallthru
          _
        %s569 = sand.u32 %s160, 1
        %s570 = scalar_lea.sflag [#allocation5], %s569
        %s571 = sand.u32 %s160, 1
        %s572 = smul.addr %s571, 16
        %s573 = scalar_lea.vmem [#allocation9], %s572
        // Predicated region
        $region61: #{tpu_custom_call.1} parent=39 // pred_check
          %p574 = pneg %p170
        $region62: #{tpu_custom_call.1} parent=39 // pred_check_branch
          %576 = sbr.rel (%p574) target = $region64
        $region63: #{tpu_custom_call.1} parent=39 // pred_region
          %s577 = smul.u32 2, %s27
          %s578 = ssub.s32 7, %s577
          %p579 = scmp.lt.s32.totalorder %s578, 2
          %s580 = scalar_select %p579, %s578, 2
          %s581 = smul.u32 128, %s580
          %s583 = ssub.s32 256, %s581
          %584 = vsyncadd %s570, %s583
          %p585 = scmp.ne.s32.totalorder 0, %s581
          %s586 = smul.addr %s577, 128
          %s587 = scalar_lea.hbm %s5, %s586
          %s588 = smul.u32 8, %s580
          %s589 = sshll.u32 %s573, 4
          %s590 = int_to_ptr.vmem [resolvable:$true] %s589
          %s591 = sshll.u32 %s588, 4
          %595 = dma.vmem_to_hbm [thread:$0]  (%p585), %s590, %s591, %s587, %s570, 128, 128, 8
        $region64: #{tpu_custom_call.1} parent=39 // pred_fallthru
          _
      $region40: #{tpu_custom_call.1} parent=5 // pred_fallthru
        _
      %p596 = scmp.le.s32.totalorder 2, %s18
      // Predicated region
      $region65: #{tpu_custom_call.1} parent=5 // pred_check
        %p597 = pneg %p596
      $region66: #{tpu_custom_call.1} parent=5 // pred_check_branch
        %599 = sbr.rel (%p597) target = $region68
      $region67: #{tpu_custom_call.1} parent=5 // pred_region
        %s600 = ssub.s32 %s18, 2
        // Predicated region
        $region69: #{tpu_custom_call.1} parent=67 // pred_check
          %p601 = pneg %p176
        $region70: #{tpu_custom_call.1} parent=67 // pred_check_branch
          %603 = sbr.rel (%p601) target = $region72
        $region71: #{tpu_custom_call.1} parent=67 // pred_region
          %s604 = sand.u32 %s161, 1
          %s605 = scalar_lea.sflag [#allocation5], %s604
          %s606 = sand.u32 %s161, 1
          %s607 = smul.addr %s606, 16
          %s608 = scalar_lea.vmem [#allocation9], %s607
          %609 = dma.done %s605, 256
        $region72: #{tpu_custom_call.1} parent=67 // pred_fallthru
          _
      $region68: #{tpu_custom_call.1} parent=5 // pred_fallthru
        _
    $region6: #{tpu_custom_call.1} parent=1 // loop_footer
      %s22 = sadd.s32 1, %s18
    $region7: #{tpu_custom_call.1} parent=1 // loop_footer_branch
      %17 = sbr.rel target = $region3
    $region8: #{tpu_custom_call.1} parent=1 // loop_exit
      _
    %610 = vsyncpa [#allocation4], 1
    %s611 = scalar_lea.sflag [#allocation4], 1
    %612 = vsyncpa %s611, 1
    %613 = vsyncpa [#allocation7], 1
    %614 = vsyncpa [#allocation5], 1
    %s615 = scalar_lea.sflag [#allocation5], 1
    %616 = vsyncpa %s615, 1

</llo_original>
